<compile_context>
chip_gen: v7x
topology: tpu7x:2x2x1
jax: 0.10.0
libtpu: 0.0.40
codegen_flags: <defaults>
</compile_context>

<pallas_src>
import functools

import jax
import jax.numpy as jnp
from jax import lax
from jax.experimental import pallas as pl
from jax.experimental.pallas import tpu as pltpu

EPS = 1e-5
LANES = 128
SUBLANES = 8
# Tile-sizing budget (bytes) for the pipelined blocks; conservative enough for
# v5e's 16 MiB scoped-VMEM default and v7x's 32 MiB scoped / 64 MiB physical.
_VMEM_TILE_BUDGET = 8 * 1024 * 1024
_VMEM_LIMIT_BYTES = 32 * 1024 * 1024
_COL_TILE_CAP = 512  # lanes; >=512-wide tiles reach ~85% of the HBM roofline


def _largest_divisor_tile(dim, multiple, cap):
    """Largest t <= cap with t % multiple == 0 and dim % t == 0; else dim."""
    if dim <= cap:
        return dim
    t = (min(cap, dim) // multiple) * multiple
    while t >= multiple:
        if dim % t == 0:
            return t
        t -= multiple
    # TODO(synk): mask ragged row/column tiles instead of falling back to the
    # full (untiled) dimension when no aligned divisor exists.
    return dim


# ----------------------------- kernels --------------------------------------


def _fused_bn_kernel(x_ref, gamma_ref, beta_ref, o_ref, *, inv_count):
    """Stats + normalize in one pass over a full-height (M, tc) column tile."""
    x = x_ref[...].astype(jnp.float32)
    # One sweep: sum and sum(x^2); var = E[x^2] - mean^2 (biased, as BatchNorm).
    col_sum = jnp.sum(x, axis=0, keepdims=True)
    col_ssq = jnp.sum(x * x, axis=0, keepdims=True)
    mean = col_sum * inv_count
    var = col_ssq * inv_count - mean * mean
    inv_std = lax.rsqrt(var + EPS)
    # Fold the affine into a single mul+add per element.
    scale = gamma_ref[...].astype(jnp.float32) * inv_std
    shift = beta_ref[...].astype(jnp.float32) - mean * scale
    o_ref[...] = (x * scale + shift).astype(o_ref.dtype)


def _stats_kernel(x_ref, sum_ref, ssq_ref, sum_sc, ssq_sc):
    """Accumulate per-column sum / sum-of-squares over the row (reduction) axis."""
    r = pl.program_id(1)

    @pl.when(r == 0)
    def _init():
        sum_sc[...] = jnp.zeros_like(sum_sc)
        ssq_sc[...] = jnp.zeros_like(ssq_sc)

    x = x_ref[...].astype(jnp.float32)
    sum_sc[...] += jnp.sum(x, axis=0, keepdims=True)
    ssq_sc[...] += jnp.sum(x * x, axis=0, keepdims=True)

    @pl.when(r == pl.num_programs(1) - 1)
    def _finalize():
        sum_ref[...] = sum_sc[...]
        ssq_ref[...] = ssq_sc[...]


def _apply_kernel(x_ref, scale_ref, shift_ref, o_ref):
    """y = x * scale + shift (affine already folded into scale/shift)."""
    x = x_ref[...].astype(jnp.float32)
    o_ref[...] = (x * scale_ref[...] + shift_ref[...]).astype(o_ref.dtype)


# ----------------------------- wrapper ---------------------------------------


@functools.partial(jax.jit, static_argnames=("row_tile_cap",))
def batch_norm_edge(e, gamma, beta, *, row_tile_cap=None):
    """BatchNormEdge forward: e (B, N, N, H), gamma/beta (H,) -> (B, N, N, H)."""
    B, N1, N2, H = e.shape
    M = B * N1 * N2

    # Lane packing for narrow channel counts: fold g consecutive rows into the
    # lane axis so loads/stores are lane-dense (H=32 would otherwise use only
    # 32/128 lanes and every store would be a masked partial store).
    g = 1
    if H < LANES and LANES % H == 0 and M % (LANES // H) == 0:
        g = LANES // H
    Mp, Cp = M // g, g * H
    x2d = e.reshape(Mp, Cp)  # pure row-major regrouping (free view in HBM)

    # Column (lane) tile: a multiple of 128 when the (packed) width exceeds it.
    tc = _largest_divisor_tile(Cp, LANES, _COL_TILE_CAP) if Cp >= LANES else Cp
    n_c = Cp // tc

    # Row (sublane) tile: sized so in+out blocks (double-buffered) fit budget.
    row_cap = max(SUBLANES, (_VMEM_TILE_BUDGET // (16 * tc)) // SUBLANES * SUBLANES)
    if row_tile_cap is not None:
        row_cap = min(row_cap, max(SUBLANES, row_tile_cap))
    tr = _largest_divisor_tile(Mp, SUBLANES, row_cap)
    n_r = Mp // tr

    # ---------------- fused single-pass path (small M, no lane fold) ---------
    if g == 1 and Mp <= row_cap:
        out2d = pl.pallas_call(
            functools.partial(_fused_bn_kernel, inv_count=1.0 / float(M)),
            out_shape=jax.ShapeDtypeStruct((Mp, Cp), e.dtype),
            grid=(n_c,),
            in_specs=[
                pl.BlockSpec((Mp, tc), lambda c: (0, c)),
                pl.BlockSpec((1, tc), lambda c: (0, c)),
                pl.BlockSpec((1, tc), lambda c: (0, c)),
            ],
            out_specs=pl.BlockSpec((Mp, tc), lambda c: (0, c)),
            compiler_params=pltpu.CompilerParams(
                dimension_semantics=("parallel",),
                vmem_limit_bytes=_VMEM_LIMIT_BYTES,
            ),
        )(x2d,
          gamma.reshape(1, H).astype(jnp.float32),
          beta.reshape(1, H).astype(jnp.float32))
        return out2d.reshape(B, N1, N2, H)

    # ---------------- two-pass path (scales to any B*N*N) ---------------------
    # Pass 1: per-(packed-)column sum and sum of squares.
    col_sum, col_ssq = pl.pallas_call(
        _stats_kernel,
        out_shape=(jax.ShapeDtypeStruct((1, Cp), jnp.float32),
                   jax.ShapeDtypeStruct((1, Cp), jnp.float32)),
        grid=(n_c, n_r),
        in_specs=[pl.BlockSpec((tr, tc), lambda c, r: (r, c))],
        out_specs=(pl.BlockSpec((1, tc), lambda c, r: (0, c)),
                   pl.BlockSpec((1, tc), lambda c, r: (0, c))),
        scratch_shapes=[pltpu.VMEM((1, tc), jnp.float32),
                        pltpu.VMEM((1, tc), jnp.float32)],
        compiler_params=pltpu.CompilerParams(
            dimension_semantics=("parallel", "arbitrary"),
            vmem_limit_bytes=_VMEM_LIMIT_BYTES,
        ),
    )(x2d)

    # Tiny (H,)-sized math in plain JAX: fold packed lane groups, then compute
    # the per-channel scale/shift with the affine fused in.
    if g > 1:
        csum = col_sum.reshape(g, H).sum(axis=0)
        cssq = col_ssq.reshape(g, H).sum(axis=0)
    else:
        csum = col_sum.reshape(H)
        cssq = col_ssq.reshape(H)
    inv_count = 1.0 / float(M)
    mean = csum * inv_count
    var = cssq * inv_count - mean * mean  # biased variance, as BatchNorm2d
    inv_std = lax.rsqrt(var + EPS)
    scale = gamma.astype(jnp.float32) * inv_std
    shift = beta.astype(jnp.float32) - mean * scale
    if g > 1:  # broadcast back across the packed lane groups
        scale = jnp.tile(scale, g)
        shift = jnp.tile(shift, g)
    scale2d = scale.reshape(1, Cp)
    shift2d = shift.reshape(1, Cp)

    # Pass 2: y = x * scale + shift, fully pipelined over (column, row) tiles.
    out2d = pl.pallas_call(
        _apply_kernel,
        out_shape=jax.ShapeDtypeStruct((Mp, Cp), e.dtype),
        grid=(n_c, n_r),
        in_specs=[pl.BlockSpec((tr, tc), lambda c, r: (r, c)),
                  pl.BlockSpec((1, tc), lambda c, r: (0, c)),
                  pl.BlockSpec((1, tc), lambda c, r: (0, c))],
        out_specs=pl.BlockSpec((tr, tc), lambda c, r: (r, c)),
        compiler_params=pltpu.CompilerParams(
            dimension_semantics=("parallel", "parallel"),
            vmem_limit_bytes=_VMEM_LIMIT_BYTES,
        ),
    )(x2d, scale2d, shift2d)
    return out2d.reshape(B, N1, N2, H)


# ----------------------------- reference & test -------------------------------


def _reference(e, gamma, beta):
    # Plain-JAX reference for BatchNorm2d(track_running_stats=False) applied
    # on the channel-last layout (matches the transpose->BN->transpose module).
    x32 = e.astype(jnp.float32)
    mean = jnp.mean(x32, axis=(0, 1, 2), keepdims=True)
    var = jnp.mean((x32 - mean) ** 2, axis=(0, 1, 2), keepdims=True)
    y = (x32 - mean) / jnp.sqrt(var + EPS)
    y = y * gamma.reshape(1, 1, 1, -1) + beta.reshape(1, 1, 1, -1)
    return y.astype(e.dtype)


if __name__ == "__main__":
    key = jax.random.PRNGKey(0)

    def run_case(shape, row_tile_cap=None):
        B, N1, N2, H = shape
        kx = jax.random.fold_in(key, H + N1)
        e = jax.random.normal(kx, shape, dtype=jnp.float32)
        # Deterministic, nontrivial affine params (PyTorch default is 1/0).
        gamma = 1.0 + 0.05 * jnp.arange(H, dtype=jnp.float32)
        beta = 0.01 * jnp.arange(H, dtype=jnp.float32)

        out = jax.block_until_ready(
            batch_norm_edge(e, gamma, beta, row_tile_cap=row_tile_cap))
        ref = _reference(e, gamma, beta)
        assert out.shape == shape
        assert jnp.allclose(out, ref, atol=1e-4, rtol=1e-4), (
            f"mismatch for shape {shape}: "
            f"max abs err {jnp.max(jnp.abs(out - ref))}")

    # Edge tensor (B, N, N, H) as produced by GMDNet edge features.
    run_case((2, 8, 8, 32))                    # lane-packed two-pass path
    run_case((2, 8, 8, 1024))                  # fused path, 2 channel tiles
    run_case((2, 8, 8, 32), row_tile_cap=8)    # multi-row-tile accumulation
    run_case((2, 8, 8, 256), row_tile_cap=16)  # unpacked two-pass path

    print("KERNEL_OK")
</pallas_src>

<mosaic_0001>
module attributes {stable_mosaic.version = 11 : i64} {
  func.func @_stats_kernel(%arg0: i32, %arg1: i32, %arg2: memref<32x128xf32, #tpu.memory_space<vmem>>, %arg3: memref<1x128xf32, #tpu.memory_space<vmem>>, %arg4: memref<1x128xf32, #tpu.memory_space<vmem>>, %arg5: memref<1x128xf32, #tpu.memory_space<vmem>>, %arg6: memref<1x128xf32, #tpu.memory_space<vmem>>) attributes {dimension_semantics = [#tpu.dimension_semantics<parallel>, #tpu.dimension_semantics<arbitrary>], iteration_bounds = array<i64: 1, 1>, scalar_prefetch = 0 : i64, scratch_operands = 2 : i64, tpu.core_type = #tpu.core_type<tc>, window_params = [{transform_indices = @transform_0, window_bounds = array<i64: 32, 128>}, {transform_indices = @transform_1, window_bounds = array<i64: 1, 128>}, {transform_indices = @transform_2, window_bounds = array<i64: 1, 128>}]} {
    %c0_i32 = arith.constant 0 : i32
    %0 = arith.cmpi eq, %arg1, %c0_i32 : i32
    %1 = arith.extui %0 : i1 to i32
    %c0_i32_0 = arith.constant 0 : i32
    %2 = arith.cmpi ne, %1, %c0_i32_0 : i32
    scf.if %2 {
      %cst_13 = arith.constant 0.000000e+00 : f32
      %18 = vector.broadcast %cst_13 : f32 to vector<1x128xf32>
      %c0_14 = arith.constant 0 : index
      %c0_15 = arith.constant 0 : index
      %19 = vector.load %arg5[%c0_14, %c0_15] : memref<1x128xf32, #tpu.memory_space<vmem>>, vector<1x128xf32>
      tpu.vector_store %arg5[%c0_14, %c0_15], %18 {strides = array<i32>} : memref<1x128xf32, #tpu.memory_space<vmem>>, vector<1x128xf32>,
      %cst_16 = arith.constant 0.000000e+00 : f32
      %20 = vector.broadcast %cst_16 : f32 to vector<1x128xf32>
      %c0_17 = arith.constant 0 : index
      %c0_18 = arith.constant 0 : index
      %21 = vector.load %arg6[%c0_17, %c0_18] : memref<1x128xf32, #tpu.memory_space<vmem>>, vector<1x128xf32>
      tpu.vector_store %arg6[%c0_17, %c0_18], %20 {strides = array<i32>} : memref<1x128xf32, #tpu.memory_space<vmem>>, vector<1x128xf32>,
    } else {
    }
    %c0 = arith.constant 0 : index
    %c0_1 = arith.constant 0 : index
    %3 = vector.load %arg2[%c0, %c0_1] : memref<32x128xf32, #tpu.memory_space<vmem>>, vector<32x128xf32>
    %c0_2 = arith.constant 0 : index
    %c0_3 = arith.constant 0 : index
    %4 = vector.load %arg5[%c0_2, %c0_3] : memref<1x128xf32, #tpu.memory_space<vmem>>, vector<1x128xf32>
    %cst = arith.constant dense<0.000000e+00> : vector<128xf32>
    %5 = vector.multi_reduction <add>, %3, %cst [0] : vector<32x128xf32> to vector<128xf32>
    %6 = vector.shape_cast %5 : vector<128xf32> to vector<1x128xf32>
    %7 = arith.addf %4, %6 : vector<1x128xf32>
    %c0_4 = arith.constant 0 : index
    %c0_5 = arith.constant 0 : index
    %8 = vector.load %arg5[%c0_4, %c0_5] : memref<1x128xf32, #tpu.memory_space<vmem>>, vector<1x128xf32>
    tpu.vector_store %arg5[%c0_4, %c0_5], %7 {strides = array<i32>} : memref<1x128xf32, #tpu.memory_space<vmem>>, vector<1x128xf32>,
    %c0_6 = arith.constant 0 : index
    %c0_7 = arith.constant 0 : index
    %9 = vector.load %arg6[%c0_6, %c0_7] : memref<1x128xf32, #tpu.memory_space<vmem>>, vector<1x128xf32>
    %10 = arith.mulf %3, %3 : vector<32x128xf32>
    %cst_8 = arith.constant dense<0.000000e+00> : vector<128xf32>
    %11 = vector.multi_reduction <add>, %10, %cst_8 [0] : vector<32x128xf32> to vector<128xf32>
    %12 = vector.shape_cast %11 : vector<128xf32> to vector<1x128xf32>
    %13 = arith.addf %9, %12 : vector<1x128xf32>
    %c0_9 = arith.constant 0 : index
    %c0_10 = arith.constant 0 : index
    %14 = vector.load %arg6[%c0_9, %c0_10] : memref<1x128xf32, #tpu.memory_space<vmem>>, vector<1x128xf32>
    tpu.vector_store %arg6[%c0_9, %c0_10], %13 {strides = array<i32>} : memref<1x128xf32, #tpu.memory_space<vmem>>, vector<1x128xf32>,
    %c0_i32_11 = arith.constant 0 : i32
    %15 = arith.cmpi eq, %arg1, %c0_i32_11 : i32
    %16 = arith.extui %15 : i1 to i32
    %c0_i32_12 = arith.constant 0 : i32
    %17 = arith.cmpi ne, %16, %c0_i32_12 : i32
    scf.if %17 {
      %c0_13 = arith.constant 0 : index
      %c0_14 = arith.constant 0 : index
      %18 = vector.load %arg5[%c0_13, %c0_14] : memref<1x128xf32, #tpu.memory_space<vmem>>, vector<1x128xf32>
      %c0_15 = arith.constant 0 : index
      %c0_16 = arith.constant 0 : index
      %19 = vector.load %arg3[%c0_15, %c0_16] : memref<1x128xf32, #tpu.memory_space<vmem>>, vector<1x128xf32>
      tpu.vector_store %arg3[%c0_15, %c0_16], %18 {strides = array<i32>} : memref<1x128xf32, #tpu.memory_space<vmem>>, vector<1x128xf32>,
      %c0_17 = arith.constant 0 : index
      %c0_18 = arith.constant 0 : index
      %20 = vector.load %arg6[%c0_17, %c0_18] : memref<1x128xf32, #tpu.memory_space<vmem>>, vector<1x128xf32>
      %c0_19 = arith.constant 0 : index
      %c0_20 = arith.constant 0 : index
      %21 = vector.load %arg4[%c0_19, %c0_20] : memref<1x128xf32, #tpu.memory_space<vmem>>, vector<1x128xf32>
      tpu.vector_store %arg4[%c0_19, %c0_20], %20 {strides = array<i32>} : memref<1x128xf32, #tpu.memory_space<vmem>>, vector<1x128xf32>,
    } else {
    }
    return
  }
  func.func @transform_0(%arg0: i32, %arg1: i32) -> (i32, i32) {
    %c0_i32 = arith.constant 0 : i32
    return %arg1, %arg0 : i32, i32
  }
  func.func @transform_1(%arg0: i32, %arg1: i32) -> (i32, i32) {
    %c0_i32 = arith.constant 0 : i32
    %c0_i32_0 = arith.constant 0 : i32
    return %c0_i32, %arg0 : i32, i32
  }
  func.func @transform_2(%arg0: i32, %arg1: i32) -> (i32, i32) {
    %c0_i32 = arith.constant 0 : i32
    %c0_i32_0 = arith.constant 0 : i32
    return %c0_i32, %arg0 : i32, i32
  }
}

module attributes {stable_mosaic.version = 11 : i64} {
  func.func @_apply_kernel(%arg0: i32, %arg1: i32, %arg2: memref<32x128xf32, #tpu.memory_space<vmem>>, %arg3: memref<1x128xf32, #tpu.memory_space<vmem>>, %arg4: memref<1x128xf32, #tpu.memory_space<vmem>>, %arg5: memref<32x128xf32, #tpu.memory_space<vmem>>) attributes {dimension_semantics = [#tpu.dimension_semantics<parallel>, #tpu.dimension_semantics<parallel>], iteration_bounds = array<i64: 1, 1>, scalar_prefetch = 0 : i64, scratch_operands = 0 : i64, tpu.core_type = #tpu.core_type<tc>, window_params = [{transform_indices = @transform_0, window_bounds = array<i64: 32, 128>}, {transform_indices = @transform_1, window_bounds = array<i64: 1, 128>}, {transform_indices = @transform_2, window_bounds = array<i64: 1, 128>}, {transform_indices = @transform_3, window_bounds = array<i64: 32, 128>}]} {
    %c0 = arith.constant 0 : index
    %c0_0 = arith.constant 0 : index
    %0 = vector.load %arg2[%c0, %c0_0] : memref<32x128xf32, #tpu.memory_space<vmem>>, vector<32x128xf32>
    %c0_1 = arith.constant 0 : index
    %c0_2 = arith.constant 0 : index
    %1 = vector.load %arg3[%c0_1, %c0_2] : memref<1x128xf32, #tpu.memory_space<vmem>>, vector<1x128xf32>
    %2 = vector.broadcast %1 : vector<1x128xf32> to vector<32x128xf32>
    %3 = arith.mulf %0, %2 : vector<32x128xf32>
    %c0_3 = arith.constant 0 : index
    %c0_4 = arith.constant 0 : index
    %4 = vector.load %arg4[%c0_3, %c0_4] : memref<1x128xf32, #tpu.memory_space<vmem>>, vector<1x128xf32>
    %5 = vector.broadcast %4 : vector<1x128xf32> to vector<32x128xf32>
    %6 = arith.addf %3, %5 : vector<32x128xf32>
    %c0_5 = arith.constant 0 : index
    %c0_6 = arith.constant 0 : index
    %7 = vector.load %arg5[%c0_5, %c0_6] : memref<32x128xf32, #tpu.memory_space<vmem>>, vector<32x128xf32>
    tpu.vector_store %arg5[%c0_5, %c0_6], %6 {strides = array<i32>} : memref<32x128xf32, #tpu.memory_space<vmem>>, vector<32x128xf32>,
    return
  }
  func.func @transform_0(%arg0: i32, %arg1: i32) -> (i32, i32) {
    %c0_i32 = arith.constant 0 : i32
    return %arg1, %arg0 : i32, i32
  }
  func.func @transform_1(%arg0: i32, %arg1: i32) -> (i32, i32) {
    %c0_i32 = arith.constant 0 : i32
    %c0_i32_0 = arith.constant 0 : i32
    return %c0_i32, %arg0 : i32, i32
  }
  func.func @transform_2(%arg0: i32, %arg1: i32) -> (i32, i32) {
    %c0_i32 = arith.constant 0 : i32
    %c0_i32_0 = arith.constant 0 : i32
    return %c0_i32, %arg0 : i32, i32
  }
  func.func @transform_3(%arg0: i32, %arg1: i32) -> (i32, i32) {
    %c0_i32 = arith.constant 0 : i32
    return %arg1, %arg0 : i32, i32
  }
}

</mosaic_0001>

<llo_original>
// kernel: tile.19
$region0: #{tile.19}
  %s0 = inlined_call_operand.vmem [shape: f32[4,32], index: 0, kind: input, shape index: {}]
  %s1 = inlined_call_operand.vmem [shape: f32[1,128], index: 1, kind: output, shape index: {}]
  $region1: #{tile.19} parent=0
    #allocation0 [shape = 'u8[4096]{0}', space=vmem, size = 0x1000, scoped, tag = 'scoped mem for output reshape']
    #allocation1 [shape = 'u8[4096]{0}', space=vmem, size = 0x1000, scoped, tag = 'scoped mem for input reshape']
    %s3 = sshllo.u32 0, 4
    %v4 = vld [vmem:[%s0] sm:%s3]
    %5 = vst [vmem:[#allocation1] sm:%s3] %v4
    %v6 = vld [vmem:[#allocation1] sm:$0x1]
    %vm7 = vcmask 261120
    %8 = vst.msk [vmem:[#allocation0] sm:$0x1] %vm7, %v6
    %s9 = scalar_lea.vmem [#allocation1], 3
    %v10 = vld [vmem:[%s9] sm:$0x1]
    %11 = vrot.lane.b32.xlu0 %v10, 96
    %v12 = vpop.permute.xlu0 %11
    %vm13 = vcmask 1048320
    %14 = vst.msk [vmem:[#allocation0] sm:$0x1] %vm13, %v12
    %s15 = scalar_lea.vmem [#allocation1], 2
    %v16 = vld [vmem:[%s15] sm:$0x1]
    %17 = vrot.lane.b32.xlu0 %v16, 64
    %v18 = vpop.permute.xlu0 %17
    %vm19 = vcmask 785920
    %20 = vst.msk [vmem:[#allocation0] sm:$0x1] %vm19, %v18
    %s21 = scalar_lea.vmem [#allocation1], 1
    %v22 = vld [vmem:[%s21] sm:$0x1]
    %23 = vrot.lane.b32.xlu0 %v22, 32
    %v24 = vpop.permute.xlu0 %23
    %vm25 = vcmask 523520
    %26 = vst.msk [vmem:[#allocation0] sm:$0x1] %vm25, %v24
    %s28 = sshllo.u32 0, 1
    %v30 = vld [vmem:[#allocation0] sm:%s28]
    %s31 = sshllo.u32 0, 1
    %32 = vst [vmem:[%s1] sm:%s31] %v30

// kernel: tile.17
$region0: #{tile.17}
  #allocation0 [shape = 's32[1]{0}', space=sflag, size = 0x4, scoped, tag = 'scoped memory for tile.17']
  %s0 = inlined_call_operand.vmem [shape: f32[32], index: 0, kind: input, shape index: {}]
  %s1 = inlined_call_operand.vmem [shape: f32[4,32], index: 1, kind: output, shape index: {}]
  // Predicated region
  $region2: #{tile.17} parent=0 // pred_check
    _
  $region3: #{tile.17} parent=0 // pred_check_branch
    %3 = sbr.rel (0) target = $region5
  $region4: #{tile.17} parent=0 // pred_region
    _
  $region5: #{tile.17} parent=0 // pred_fallthru
    _
  %v4 = vld [vmem:[%s0] ss:$0 sm:$0xff]
  %5 = vst [vmem:[%s1] sm:$0xf] %v4

// kernel: batch_norm_edge.2
$region0: #{batch_norm_edge.2}
  #allocation0 [shape = 'u32[]', space=smem, size = 0x4, offset = 0x4, fixed_abs, tag = 'smem constant byte address 0x4 - core index']
  #allocation1 [shape = 'u32[144,128]{1,0:T(1,128)}', space=vmem, size = 0x12000, scoped, tag = 'internal scratch']
  #allocation2 [shape = 'f32[1,128]{1,0:T(1,128)}', space=vmem, size = 0x200, scoped, tag = 'scratch operand']
  #allocation3 [shape = 'f32[1,128]{1,0:T(1,128)}', space=vmem, size = 0x200, scoped, tag = 'scratch operand']
  %s0 = inlined_call_operand.vmem [shape: f32[32,128], index: 0, kind: input, shape index: {}]
  %s1 = inlined_call_operand.vmem [shape: f32[1,128], index: 1, kind: output, shape index: {0}]
  %s2 = inlined_call_operand.vmem [shape: f32[1,128], index: 2, kind: output, shape index: {1}]
  %3 = xla_tuple %s1, %s2
  %s4 = sld [smem:[#allocation0]]
  $region30: #{batch_norm_edge.2} parent=0
    _
  %s6 = ssub.s32 1, %s4
  %s7 = scalar_select 0, %s6, %s4
  // Predicated region
  $region2: #{batch_norm_edge.2} parent=0 // pred_check
    _
  $region3: #{batch_norm_edge.2} parent=0 // pred_check_branch
    %9 = sbr.rel (0) target = $region5
  $region4: #{batch_norm_edge.2} parent=0 // pred_region
    _
  $region5: #{batch_norm_edge.2} parent=0 // pred_fallthru
    _
  %p10 = scmp.eq.s32.totalorder 0, 0
  // Predicated region
  $region6: #{batch_norm_edge.2} parent=0 // pred_check
    %p11 = pneg %p10
  $region7: #{batch_norm_edge.2} parent=0 // pred_check_branch
    %13 = sbr.rel (%p11) target = $region9
  $region8: #{batch_norm_edge.2} parent=0 // pred_region
    %14 = vst [vmem:[#allocation2] sm:$0x1] 0.0
    %15 = vst [vmem:[#allocation3] sm:$0x1] 0.0
  $region9: #{batch_norm_edge.2} parent=0 // pred_fallthru
    _
  %v16 = vld [vmem:[%s0] sm:$0xff]
  %v17 = vld [vmem:[%s0 + $0x8] sm:$0xff]
  %v18 = vld [vmem:[%s0 + $0x10] sm:$0xff]
  %v19 = vld [vmem:[%s0 + $0x18] sm:$0xff]
  %v20 = vld [vmem:[#allocation2] sm:$0x1]
  %v21 = vadd.f32 %v16, %v17
  %v22 = vadd.f32 %v21, %v18
  %v23 = vadd.f32 %v22, %v19
  %v24 = vrot.slane %v23, 4
  %v25 = vadd.f32 %v23, %v24
  %v26 = vrot.slane %v25, 2
  %v27 = vadd.f32 %v25, %v26
  %v28 = vrot.slane %v27, 1
  %v29 = vadd.f32 %v27, %v28
  %v30 = vadd.f32 %v20, %v29
  %31 = vst [vmem:[#allocation2] sm:$0x1] %v30
  %v32 = vld [vmem:[#allocation3] sm:$0x1]
  %v33 = vmul.f32 %v16, %v16
  %v34 = vmul.f32 %v17, %v17
  %v35 = vmul.f32 %v18, %v18
  %v36 = vmul.f32 %v19, %v19
  %v37 = vadd.f32 %v33, %v34
  %v38 = vadd.f32 %v37, %v35
  %v39 = vadd.f32 %v38, %v36
  %v40 = vrot.slane %v39, 4
  %v41 = vadd.f32 %v39, %v40
  %v42 = vrot.slane %v41, 2
  %v43 = vadd.f32 %v41, %v42
  %v44 = vrot.slane %v43, 1
  %v45 = vadd.f32 %v43, %v44
  %v46 = vadd.f32 %v32, %v45
  %47 = vst [vmem:[#allocation3] sm:$0x1] %v46
  // Predicated region
  $region10: #{batch_norm_edge.2} parent=0 // pred_check
    %p48 = pneg %p10
  $region11: #{batch_norm_edge.2} parent=0 // pred_check_branch
    %50 = sbr.rel (%p48) target = $region13
  $region12: #{batch_norm_edge.2} parent=0 // pred_region
    %v51 = vld [vmem:[#allocation2] sm:$0x1]
    %52 = vst [vmem:[%s1] sm:$0x1] %v51
    %v53 = vld [vmem:[#allocation3] sm:$0x1]
    %54 = vst [vmem:[%s2] sm:$0x1] %v53
  $region13: #{batch_norm_edge.2} parent=0 // pred_fallthru
    _
  // Predicated region
  $region14: #{batch_norm_edge.2} parent=0 // pred_check
    _
  $region15: #{batch_norm_edge.2} parent=0 // pred_check_branch
    %56 = sbr.rel (0) target = $region17
  $region16: #{batch_norm_edge.2} parent=0 // pred_region
    _
  $region17: #{batch_norm_edge.2} parent=0 // pred_fallthru
    _
  // Predicated region
  $region18: #{batch_norm_edge.2} parent=0 // pred_check
    _
  $region19: #{batch_norm_edge.2} parent=0 // pred_check_branch
    %58 = sbr.rel (0) target = $region21
  $region20: #{batch_norm_edge.2} parent=0 // pred_region
    _
  $region21: #{batch_norm_edge.2} parent=0 // pred_fallthru
    _
  // Predicated region
  $region22: #{batch_norm_edge.2} parent=0 // pred_check
    _
  $region23: #{batch_norm_edge.2} parent=0 // pred_check_branch
    %60 = sbr.rel (0) target = $region25
  $region24: #{batch_norm_edge.2} parent=0 // pred_region
    _
  $region25: #{batch_norm_edge.2} parent=0 // pred_fallthru
    _
  // Predicated region
  $region26: #{batch_norm_edge.2} parent=0 // pred_check
    _
  $region27: #{batch_norm_edge.2} parent=0 // pred_check_branch
    %62 = sbr.rel (0) target = $region29
  $region28: #{batch_norm_edge.2} parent=0 // pred_region
    _
  $region29: #{batch_norm_edge.2} parent=0 // pred_fallthru
    _

// kernel: batch_norm_edge.3
$region0: #{batch_norm_edge.3}
  #allocation0 [shape = 'u32[]', space=smem, size = 0x4, offset = 0x4, fixed_abs, tag = 'smem constant byte address 0x4 - core index']
  #allocation1 [shape = 'u32[144,128]{1,0:T(1,128)}', space=vmem, size = 0x12000, scoped, tag = 'internal scratch']
  %s0 = inlined_call_operand.vmem [shape: f32[32,128], index: 0, kind: input, shape index: {}]
  %s1 = inlined_call_operand.vmem [shape: f32[1,128], index: 1, kind: input, shape index: {}]
  %s2 = inlined_call_operand.vmem [shape: f32[1,128], index: 2, kind: input, shape index: {}]
  %s3 = inlined_call_operand.vmem [shape: f32[32,128], index: 3, kind: output, shape index: {}]
  %s4 = sld [smem:[#allocation0]]
  $region22: #{batch_norm_edge.3} parent=0
    _
  %s6 = ssub.s32 1, %s4
  %s7 = scalar_select 0, %s6, %s4
  // Predicated region
  $region2: #{batch_norm_edge.3} parent=0 // pred_check
    _
  $region3: #{batch_norm_edge.3} parent=0 // pred_check_branch
    %9 = sbr.rel (0) target = $region5
  $region4: #{batch_norm_edge.3} parent=0 // pred_region
    _
  $region5: #{batch_norm_edge.3} parent=0 // pred_fallthru
    _
  // Predicated region
  $region6: #{batch_norm_edge.3} parent=0 // pred_check
    _
  $region7: #{batch_norm_edge.3} parent=0 // pred_check_branch
    %11 = sbr.rel (0) target = $region9
  $region8: #{batch_norm_edge.3} parent=0 // pred_region
    _
  $region9: #{batch_norm_edge.3} parent=0 // pred_fallthru
    _
  // Predicated region
  $region10: #{batch_norm_edge.3} parent=0 // pred_check
    _
  $region11: #{batch_norm_edge.3} parent=0 // pred_check_branch
    %13 = sbr.rel (0) target = $region13
  $region12: #{batch_norm_edge.3} parent=0 // pred_region
    _
  $region13: #{batch_norm_edge.3} parent=0 // pred_fallthru
    _
  %v14 = vld [vmem:[%s0] sm:$0xff]
  %v15 = vld [vmem:[%s0 + $0x8] sm:$0xff]
  %v16 = vld [vmem:[%s0 + $0x10] sm:$0xff]
  %v17 = vld [vmem:[%s0 + $0x18] sm:$0xff]
  %v18 = vld [vmem:[%s1] sm:$0x1]
  %v20 = vlaneseq
  %v21 = vshrl.u32 %v20, 7
  %v22 = vsub.s32 0, %v21
  %v23 = vrot.slane %v18, %v22
  %v25 = vmul.f32 %v14, %v23
  %v26 = vmul.f32 %v15, %v23
  %v27 = vmul.f32 %v16, %v23
  %v28 = vmul.f32 %v17, %v23
  %v29 = vld [vmem:[%s2] sm:$0x1]
  %v31 = vlaneseq
  %v32 = vshrl.u32 %v31, 7
  %v33 = vsub.s32 0, %v32
  %v34 = vrot.slane %v29, %v33
  %v36 = vadd.f32 %v25, %v34
  %v37 = vadd.f32 %v26, %v34
  %v38 = vadd.f32 %v27, %v34
  %v39 = vadd.f32 %v28, %v34
  %40 = vst [vmem:[%s3] sm:$0xff] %v36
  %41 = vst [vmem:[%s3 + $0x8] sm:$0xff] %v37
  %42 = vst [vmem:[%s3 + $0x10] sm:$0xff] %v38
  %43 = vst [vmem:[%s3 + $0x18] sm:$0xff] %v39
  // Predicated region
  $region14: #{batch_norm_edge.3} parent=0 // pred_check
    _
  $region15: #{batch_norm_edge.3} parent=0 // pred_check_branch
    %45 = sbr.rel (0) target = $region17
  $region16: #{batch_norm_edge.3} parent=0 // pred_region
    _
  $region17: #{batch_norm_edge.3} parent=0 // pred_fallthru
    _
  // Predicated region
  $region18: #{batch_norm_edge.3} parent=0 // pred_check
    _
  $region19: #{batch_norm_edge.3} parent=0 // pred_check_branch
    %47 = sbr.rel (0) target = $region21
  $region20: #{batch_norm_edge.3} parent=0 // pred_region
    _
  $region21: #{batch_norm_edge.3} parent=0 // pred_fallthru
    _

</llo_original>
